<compile_context>
chip_gen: v7x
topology: tpu7x:2x2x1
jax: 0.10.0
libtpu: 0.0.40
codegen_flags: <defaults>
</compile_context>

<pallas_src>
import functools

import jax
import jax.numpy as jnp
from jax import lax
from jax.experimental import pallas as pl
from jax.experimental.pallas import tpu as pltpu

_LANE = 128


def _round_up(n, m):
    return ((n + m - 1) // m) * m


def _cross_attention_kernel(x_ref, y_ref, wq_ref, wk_ref, wv_ref, o_ref,
                            q_sc, k_sc, v_sc, *, nq, nk, block_b, approx):
    """One grid step = `block_b` batch elements, presented as flat 2-D blocks:
       x_ref: (block_b*Nq, Dq), y_ref: (block_b*Nk, Din),
       o_ref: (block_b*Nq, D_p) with D_p a multiple of 128 (lane-dense store).
    """
    cdt = wq_ref.dtype            # MXU operand dtype (bf16 fast path, or f32)

    # ---- Stage 1: Q/K/V projections, batch flattened into the M dimension ---
    # One matmul per weight per grid step.  Inputs are DMA'd in their HBM dtype
    # and cast here (VPU), not in the wrapper (saves a full extra HBM pass).
    xb = x_ref[...].astype(cdt)                                  # (mq, Dq)
    yb = y_ref[...].astype(cdt)                                  # (mk, Din)

    # Wq already carries the 1/sqrt(out_dim) score scale.
    q = jnp.dot(xb, wq_ref[...], preferred_element_type=jnp.float32)   # (mq, D_p)
    k = jnp.dot(yb, wk_ref[...], preferred_element_type=jnp.float32)   # (mk, D_p)
    k_c = k.astype(cdt)                       # single K cast, reused twice
    # V = value(key(y))  — PyTorch quirk reproduced intentionally.
    v = jnp.dot(k_c, wv_ref[...], preferred_element_type=jnp.float32)  # (mk, D_p)

    q_sc[...] = q.astype(cdt)
    k_sc[...] = k_c
    v_sc[...] = v.astype(cdt)

    # ---- Stage 2: per-batch scores / softmax / PV ----------------------------
    # fori_loop (not a static unroll) bounds live ranges so the f32
    # intermediates never spill out of the vreg file.
    def body(bi, carry):
        qo = pl.multiple_of(bi * nq, nq)
        ko = pl.multiple_of(bi * nk, nk)
        qb = q_sc[pl.ds(qo, nq), :]                              # (Nq, D_p)
        kb = k_sc[pl.ds(ko, nk), :]                              # (Nk, D_p)
        vb = v_sc[pl.ds(ko, nk), :]                              # (Nk, D_p)

        # Contract the last dims of Q and K — no explicit transpose (no vxpose).
        s = lax.dot_general(qb, kb, (((1,), (1,)), ((), ())),
                            preferred_element_type=jnp.float32)  # (Nq, Nk)

        # Numerically-stable softmax in f32; denominator folded in below.
        s = s - jnp.max(s, axis=-1, keepdims=True)
        p = jnp.exp(s)
        l = jnp.sum(p, axis=-1, keepdims=True)                   # (Nq, 1)

        acc = jnp.dot(p.astype(cdt), vb,
                      preferred_element_type=jnp.float32)        # (Nq, D_p)
        o = acc * pl.reciprocal(l, approx=approx)
        o_ref[pl.ds(qo, nq), :] = o.astype(o_ref.dtype)
        return carry

    lax.fori_loop(0, block_b, body, 0)


def prepare_cross_attention_params(wq, wk, wv, *, out_dim,
                                   compute_dtype=jnp.bfloat16):
    """One-time weight prep (do NOT redo per forward call): transpose to
    (in, out), fold the 1/sqrt(out_dim) score scale into Wq, zero-pad the
    OUTPUT dims (and Wv's contracting dim) to a multiple of 128, cast to the
    MXU operand dtype.  Activations never need padding: padded weight
    columns/rows are zero, so the math stays exact."""
    hid, in_q = wq.shape           # query: (hid_q_dim, in_q_dim)
    o_k, d_in = wk.shape           # key/value: (out_dim, in_dim)
    assert o_k == out_dim and wv.shape == (out_dim, d_in)
    # The PyTorch forward (Q@K^T and V = value(key(y))) requires:
    assert hid == out_dim and d_in == out_dim, (
        "CrossAttention.forward requires in_dim == out_dim == hid_q_dim")

    d_p = _round_up(out_dim, _LANE)
    scale = 1.0 / float(out_dim) ** 0.5
    f32 = jnp.float32

    wq_t = jnp.zeros((in_q, d_p), f32).at[:, :hid].set(wq.astype(f32).T * scale)
    wk_t = jnp.zeros((d_in, d_p), f32).at[:, :out_dim].set(wk.astype(f32).T)
    wv_t = jnp.zeros((d_p, d_p), f32).at[:d_in, :out_dim].set(wv.astype(f32).T)
    cd = jnp.dtype(compute_dtype)
    return wq_t.astype(cd), wk_t.astype(cd), wv_t.astype(cd)


def _pick_block_b(batch, nq, nk, *, target_rows=256, max_block=None):
    """Pick the batch block so block_b*Nk ~ target_rows MXU rows (fills the
    256-row MXU on v6e/v7x), the 2-D block second-to-last dims stay 8-aligned,
    and the grid has an even number of steps (balanced across v7x's two
    TensorCores).  On single-TC v5e/v6e you may override block_b to take one
    fatter grid step instead."""
    if max_block is None:
        max_block = max(1, target_rows // max(nk, 1))

    def legal(d):
        # (8,128) rule: block second-to-last dim must be 8-divisible unless the
        # block spans the full array (d == batch always spans it).
        return d == batch or ((d * nq) % 8 == 0 and (d * nk) % 8 == 0)

    divs = [d for d in range(1, batch + 1) if batch % d == 0 and legal(d)]
    capped = [d for d in divs if d <= max_block] or divs
    even = [d for d in capped if (batch // d) % 2 == 0]
    pool = even or capped
    return max(pool)


def cross_attention(x, y, params, *, out_dim, block_b=None, out_dtype=None):
    """x: (B, Nq, in_q_dim), y: (B, Nk, in_dim);
    params: output of prepare_cross_attention_params."""
    wq_t, wk_t, wv_t = params
    cdt = wq_t.dtype
    B, Nq, Dq = x.shape
    B2, Nk, Din = y.shape
    assert B2 == B
    dq_w, d_p = wq_t.shape
    assert dq_w == Dq, "x feature dim must match query weight in_q_dim"
    assert wk_t.shape == (Din, d_p) and wv_t.shape == (d_p, d_p)
    assert out_dim <= d_p
    if out_dtype is None:
        out_dtype = x.dtype

    if block_b is None:
        block_b = _pick_block_b(B, Nq, Nk)
    assert B % block_b == 0
    if block_b != B:
        assert (block_b * Nq) % 8 == 0 and (block_b * Nk) % 8 == 0, (
            "block_b*Nq and block_b*Nk must be multiples of 8 (or block_b == B)")
    grid = (B // block_b,)
    mq, mk = block_b * Nq, block_b * Nk

    # Free leading-dim reshapes (no data movement): present the batch flattened
    # into the matmul M dimension.
    x2 = x.reshape(B * Nq, Dq)
    y2 = y.reshape(B * Nk, Din)

    approx = jnp.dtype(cdt) != jnp.dtype(jnp.float32)
    kernel = functools.partial(_cross_attention_kernel,
                               nq=Nq, nk=Nk, block_b=block_b, approx=approx)

    # Conservative VMEM budget: double-buffered activation blocks + output +
    # weights + Q/K/V scratch + f32 intermediates, with margin.  Explicit so
    # large block_b doesn't trip v5e's 16 MiB scoped default; capped at 64 MiB
    # (v7x physical VMEM).
    itc = jnp.dtype(cdt).itemsize
    vmem_est = (
        2 * (mq * Dq * x.dtype.itemsize + mk * Din * y.dtype.itemsize)
        + 2 * mq * d_p * jnp.dtype(out_dtype).itemsize
        + 2 * (wq_t.size + wk_t.size + wv_t.size) * itc
        + (mq + 2 * mk) * d_p * itc            # Q/K/V scratch
        + (mq + 2 * mk) * d_p * 4              # f32 projection results
        + 2 * Nq * Nk * 4)                     # scores
    vmem_limit = min(64 << 20, max(32 << 20, int(1.5 * vmem_est)))

    out2 = pl.pallas_call(
        kernel,
        out_shape=jax.ShapeDtypeStruct((B * Nq, d_p), out_dtype),
        grid_spec=pltpu.PrefetchScalarGridSpec(
            num_scalar_prefetch=0,
            grid=grid,
            in_specs=[
                pl.BlockSpec((mq, Dq), lambda b: (b, 0)),
                pl.BlockSpec((mk, Din), lambda b: (b, 0)),
                # Weights: constant index_map -> fetched once, VMEM-resident
                # across the whole batch grid.
                pl.BlockSpec((Dq, d_p), lambda b: (0, 0)),
                pl.BlockSpec((Din, d_p), lambda b: (0, 0)),
                pl.BlockSpec((d_p, d_p), lambda b: (0, 0)),
            ],
            out_specs=pl.BlockSpec((mq, d_p), lambda b: (b, 0)),
            scratch_shapes=[
                pltpu.VMEM((mq, d_p), cdt),     # Q
                pltpu.VMEM((mk, d_p), cdt),     # K (compute dtype, reused)
                pltpu.VMEM((mk, d_p), cdt),     # V
            ],
        ),
        compiler_params=pltpu.CompilerParams(
            dimension_semantics=("parallel",),
            vmem_limit_bytes=vmem_limit),
    )(x2, y2, wq_t, wk_t, wv_t)

    out = out2.reshape(B, Nq, d_p)
    if d_p != out_dim:
        out = out[..., :out_dim]   # slice lane padding back off (wrapper glue)
    return out


def cross_attention_ref(x, y, wq, wk, wv, out_dim):
    hp = lax.Precision.HIGHEST
    q = jnp.matmul(x, wq.T, precision=hp)
    k = jnp.matmul(y, wk.T, precision=hp)
    s = jnp.einsum('bqh,bkh->bqk', q, k, precision=hp) / (out_dim ** 0.5)
    p = jax.nn.softmax(s, axis=-1)
    v = jnp.matmul(k, wv.T, precision=hp)
    return jnp.einsum('bqk,bkd->bqd', p, v, precision=hp)


if __name__ == "__main__":
    # Small shapes consistent with the module; the real model uses
    # in_dim = out_dim = in_q_dim = hid_q_dim = 768 (a multiple of 128, so no
    # padding/slicing happens at all), Nq = attr_num, Nk = 197.
    B, Nq, Nk = 4, 8, 16
    in_q_dim = 16
    in_dim = out_dim = hid_q_dim = 32

    key = jax.random.PRNGKey(0)
    kx, ky, k1, k2, k3 = jax.random.split(key, 5)

    x = jax.random.normal(kx, (B, Nq, in_q_dim), dtype=jnp.float32)
    y = jax.random.normal(ky, (B, Nk, in_dim), dtype=jnp.float32)

    # nn.Linear weight layout: (out_features, in_features), bias=False.
    wq = jax.random.normal(k1, (hid_q_dim, in_q_dim), dtype=jnp.float32) * 0.1
    wk = jax.random.normal(k2, (out_dim, in_dim), dtype=jnp.float32) * 0.1
    wv = jax.random.normal(k3, (out_dim, in_dim), dtype=jnp.float32) * 0.1

    ref = cross_attention_ref(x, y, wq, wk, wv, out_dim)

    # f32 MXU-operand path (exact reciprocal).
    params_f32 = prepare_cross_attention_params(
        wq, wk, wv, out_dim=out_dim, compute_dtype=jnp.float32)
    out_f32 = jax.block_until_ready(
        cross_attention(x, y, params_f32, out_dim=out_dim))
    assert out_f32.shape == (B, Nq, out_dim)
    assert jnp.allclose(out_f32, ref, atol=5e-3, rtol=5e-3), \
        "f32 path mismatch vs pure-JAX reference"

    # bf16 MXU-operand fast path (v5e/v6e/v7x), f32 accumulation.
    params_bf16 = prepare_cross_attention_params(
        wq, wk, wv, out_dim=out_dim, compute_dtype=jnp.bfloat16)
    out_bf16 = jax.block_until_ready(
        cross_attention(x, y, params_bf16, out_dim=out_dim))
    assert out_bf16.shape == (B, Nq, out_dim)
    assert jnp.allclose(out_bf16.astype(jnp.float32), ref,
                        atol=3e-2, rtol=3e-2), \
        "bf16 path mismatch vs pure-JAX reference"

    print("KERNEL_OK")
</pallas_src>

<mosaic_0001>
module attributes {stable_mosaic.version = 11 : i64} {
  func.func @_cross_attention_kernel(%arg0: i32, %arg1: memref<16x16xf32, #tpu.memory_space<vmem>>, %arg2: memref<32x32xf32, #tpu.memory_space<vmem>>, %arg3: memref<16x128xf32, #tpu.memory_space<vmem>>, %arg4: memref<32x128xf32, #tpu.memory_space<vmem>>, %arg5: memref<128x128xf32, #tpu.memory_space<vmem>>, %arg6: memref<16x128xf32, #tpu.memory_space<vmem>>, %arg7: memref<16x128xf32, #tpu.memory_space<vmem>>, %arg8: memref<32x128xf32, #tpu.memory_space<vmem>>, %arg9: memref<32x128xf32, #tpu.memory_space<vmem>>) attributes {dimension_semantics = [#tpu.dimension_semantics<parallel>], iteration_bounds = array<i64: 2>, scalar_prefetch = 0 : i64, scratch_operands = 3 : i64, tpu.core_type = #tpu.core_type<tc>, window_params = [{transform_indices = @transform_0, window_bounds = array<i64: 16, 16>}, {transform_indices = @transform_1, window_bounds = array<i64: 32, 32>}, {pipeline_mode = #tpu.pipeline_mode<synchronous>, transform_indices = @transform_2, window_bounds = array<i64: 16, 128>}, {pipeline_mode = #tpu.pipeline_mode<synchronous>, transform_indices = @transform_3, window_bounds = array<i64: 32, 128>}, {pipeline_mode = #tpu.pipeline_mode<synchronous>, transform_indices = @transform_4, window_bounds = array<i64: 128, 128>}, {transform_indices = @transform_5, window_bounds = array<i64: 16, 128>}]} {
    %c0 = arith.constant 0 : index
    %c0_0 = arith.constant 0 : index
    %0 = vector.load %arg1[%c0, %c0_0] : memref<16x16xf32, #tpu.memory_space<vmem>>, vector<16x16xf32>
    %c0_1 = arith.constant 0 : index
    %c0_2 = arith.constant 0 : index
    %1 = vector.load %arg2[%c0_1, %c0_2] : memref<32x32xf32, #tpu.memory_space<vmem>>, vector<32x32xf32>
    %c0_3 = arith.constant 0 : index
    %c0_4 = arith.constant 0 : index
    %2 = vector.load %arg3[%c0_3, %c0_4] : memref<16x128xf32, #tpu.memory_space<vmem>>, vector<16x128xf32>
    %cst = arith.constant dense<0.000000e+00> : vector<16x128xf32>
    %3 = tpu.matmul %0, %2, %cst {dimension_numbers = #tpu.dot_dimension_numbers<[1], [0], [0], [1], [0, 0, 1, 1], [], []>} : vector<16x16xf32>, vector<16x128xf32>, vector<16x128xf32> -> vector<16x128xf32>
    %c0_5 = arith.constant 0 : index
    %c0_6 = arith.constant 0 : index
    %4 = vector.load %arg4[%c0_5, %c0_6] : memref<32x128xf32, #tpu.memory_space<vmem>>, vector<32x128xf32>
    %cst_7 = arith.constant dense<0.000000e+00> : vector<32x128xf32>
    %5 = tpu.matmul %1, %4, %cst_7 {dimension_numbers = #tpu.dot_dimension_numbers<[1], [0], [0], [1], [0, 0, 1, 1], [], []>} : vector<32x32xf32>, vector<32x128xf32>, vector<32x128xf32> -> vector<32x128xf32>
    %c0_8 = arith.constant 0 : index
    %c0_9 = arith.constant 0 : index
    %6 = vector.load %arg5[%c0_8, %c0_9] : memref<128x128xf32, #tpu.memory_space<vmem>>, vector<128x128xf32>
    %cst_10 = arith.constant dense<0.000000e+00> : vector<32x128xf32>
    %7 = tpu.matmul %5, %6, %cst_10 {dimension_numbers = #tpu.dot_dimension_numbers<[1], [0], [0], [1], [0, 0, 1, 1], [], []>} : vector<32x128xf32>, vector<128x128xf32>, vector<32x128xf32> -> vector<32x128xf32>
    %c0_11 = arith.constant 0 : index
    %c0_12 = arith.constant 0 : index
    %8 = vector.load %arg7[%c0_11, %c0_12] : memref<16x128xf32, #tpu.memory_space<vmem>>, vector<16x128xf32>
    tpu.vector_store %arg7[%c0_11, %c0_12], %3 {strides = array<i32>} : memref<16x128xf32, #tpu.memory_space<vmem>>, vector<16x128xf32>,
    %c0_13 = arith.constant 0 : index
    %c0_14 = arith.constant 0 : index
    %9 = vector.load %arg8[%c0_13, %c0_14] : memref<32x128xf32, #tpu.memory_space<vmem>>, vector<32x128xf32>
    tpu.vector_store %arg8[%c0_13, %c0_14], %5 {strides = array<i32>} : memref<32x128xf32, #tpu.memory_space<vmem>>, vector<32x128xf32>,
    %c0_15 = arith.constant 0 : index
    %c0_16 = arith.constant 0 : index
    %10 = vector.load %arg9[%c0_15, %c0_16] : memref<32x128xf32, #tpu.memory_space<vmem>>, vector<32x128xf32>
    tpu.vector_store %arg9[%c0_15, %c0_16], %7 {strides = array<i32>} : memref<32x128xf32, #tpu.memory_space<vmem>>, vector<32x128xf32>,
    %c0_i32 = arith.constant 0 : i32
    %c2_i32 = arith.constant 2 : i32
    %11 = arith.addi %c0_i32, %c2_i32 : i32
    %c1_i32 = arith.constant 1 : i32
    scf.for %arg10 = %c0_i32 to %11 step %c1_i32  : i32 {
      %c8_i32 = arith.constant 8 : i32
      %12 = arith.muli %arg10, %c8_i32 : i32
      %13 = tpu.assume_multiple %12, 8 : i32
      %c16_i32 = arith.constant 16 : i32
      %14 = arith.muli %arg10, %c16_i32 : i32
      %15 = tpu.assume_multiple %14, 16 : i32
      %16 = arith.index_cast %13 : i32 to index
      %c0_18 = arith.constant 0 : index
      %17 = vector.load %arg7[%16, %c0_18] : memref<16x128xf32, #tpu.memory_space<vmem>>, vector<8x128xf32>
      %18 = arith.index_cast %15 : i32 to index
      %c0_19 = arith.constant 0 : index
      %19 = vector.load %arg8[%18, %c0_19] : memref<32x128xf32, #tpu.memory_space<vmem>>, vector<16x128xf32>
      %20 = arith.index_cast %15 : i32 to index
      %c0_20 = arith.constant 0 : index
      %21 = vector.load %arg9[%20, %c0_20] : memref<32x128xf32, #tpu.memory_space<vmem>>, vector<16x128xf32>
      %cst_21 = arith.constant dense<0.000000e+00> : vector<8x16xf32>
      %22 = tpu.matmul %17, %19, %cst_21 {dimension_numbers = #tpu.dot_dimension_numbers<[1], [1], [0], [0], [0, 0, 1, 0], [], []>} : vector<8x128xf32>, vector<16x128xf32>, vector<8x16xf32> -> vector<8x16xf32>
      %cst_22 = arith.constant dense<0xFF800000> : vector<8xf32>
      %23 = vector.multi_reduction <maximumf>, %22, %cst_22 [1] : vector<8x16xf32> to vector<8xf32>
      %24 = vector.shape_cast %23 : vector<8xf32> to vector<8x1xf32>
      %25 = vector.broadcast %24 : vector<8x1xf32> to vector<8x16xf32>
      %26 = arith.subf %22, %25 : vector<8x16xf32>
      %27 = math.exp %26 : vector<8x16xf32>
      %cst_23 = arith.constant dense<0.000000e+00> : vector<8xf32>
      %28 = vector.multi_reduction <add>, %27, %cst_23 [1] : vector<8x16xf32> to vector<8xf32>
      %29 = vector.shape_cast %28 : vector<8xf32> to vector<8x1xf32>
      %cst_24 = arith.constant dense<0.000000e+00> : vector<8x128xf32>
      %30 = tpu.matmul %27, %21, %cst_24 {dimension_numbers = #tpu.dot_dimension_numbers<[1], [0], [0], [1], [0, 0, 1, 1], [], []>} : vector<8x16xf32>, vector<16x128xf32>, vector<8x128xf32> -> vector<8x128xf32>
      %31 = tpu.reciprocal %29 : vector<8x1xf32> -> vector<8x1xf32>
      %32 = vector.broadcast %31 : vector<8x1xf32> to vector<8x128xf32>
      %33 = arith.mulf %30, %32 : vector<8x128xf32>
      %34 = arith.index_cast %13 : i32 to index
      %c0_25 = arith.constant 0 : index
      %35 = vector.load %arg6[%34, %c0_25] : memref<16x128xf32, #tpu.memory_space<vmem>>, vector<8x128xf32>
      tpu.vector_store %arg6[%34, %c0_25], %33 {strides = array<i32>} : memref<16x128xf32, #tpu.memory_space<vmem>>, vector<8x128xf32>,
    }
    %c2_i32_17 = arith.constant 2 : i32
    return
  }
  func.func @transform_0(%arg0: i32) -> (i32, i32) {
    %c0_i32 = arith.constant 0 : i32
    %c0_i32_0 = arith.constant 0 : i32
    return %arg0, %c0_i32 : i32, i32
  }
  func.func @transform_1(%arg0: i32) -> (i32, i32) {
    %c0_i32 = arith.constant 0 : i32
    %c0_i32_0 = arith.constant 0 : i32
    return %arg0, %c0_i32 : i32, i32
  }
  func.func @transform_2(%arg0: i32) -> (i32, i32) {
    %c0_i32 = arith.constant 0 : i32
    %c0_i32_0 = arith.constant 0 : i32
    %c0_i32_1 = arith.constant 0 : i32
    return %c0_i32, %c0_i32_0 : i32, i32
  }
  func.func @transform_3(%arg0: i32) -> (i32, i32) {
    %c0_i32 = arith.constant 0 : i32
    %c0_i32_0 = arith.constant 0 : i32
    %c0_i32_1 = arith.constant 0 : i32
    return %c0_i32, %c0_i32_0 : i32, i32
  }
  func.func @transform_4(%arg0: i32) -> (i32, i32) {
    %c0_i32 = arith.constant 0 : i32
    %c0_i32_0 = arith.constant 0 : i32
    %c0_i32_1 = arith.constant 0 : i32
    return %c0_i32, %c0_i32_0 : i32, i32
  }
  func.func @transform_5(%arg0: i32) -> (i32, i32) {
    %c0_i32 = arith.constant 0 : i32
    %c0_i32_0 = arith.constant 0 : i32
    return %arg0, %c0_i32 : i32, i32
  }
}

</mosaic_0001>

<llo_original>
// kernel: tpu_custom_call.1
$region0: #{tpu_custom_call.1}
  #allocation0 [shape = 'u32[]', space=smem, size = 0x4, offset = 0x4, fixed_abs, tag = 'smem constant byte address 0x4 - core index']
  #allocation1 [shape = 'u32[144,128]{1,0:T(1,128)}', space=vmem, size = 0x12000, scoped, tag = 'internal scratch']
  #allocation2 [shape = 'f32[16,128]{1,0:T(8,128)}', space=vmem, size = 0x2000, scoped, tag = 'scratch operand']
  #allocation3 [shape = 'f32[32,128]{1,0:T(8,128)}', space=vmem, size = 0x4000, scoped, tag = 'scratch operand']
  #allocation4 [shape = 'f32[32,128]{1,0:T(8,128)}', space=vmem, size = 0x4000, scoped, tag = 'scratch operand']
  %s0 = inlined_call_operand.vmem [shape: f32[32,16], index: 0, kind: input, shape index: {}]
  %s1 = inlined_call_operand.vmem [shape: f32[64,32], index: 1, kind: input, shape index: {}]
  %s2 = inlined_call_operand.vmem [shape: f32[16,128], index: 2, kind: input, shape index: {}]
  %s3 = inlined_call_operand.hbm [shape: f32[32,128], index: 3, kind: input, shape index: {}]
  %s4 = inlined_call_operand.vmem [shape: f32[128,128], index: 4, kind: input, shape index: {}]
  %s5 = inlined_call_operand.hbm [shape: f32[32,128], index: 5, kind: output, shape index: {}]
  %s6 = sld [smem:[#allocation0]]
  $region64: #{tpu_custom_call.1} parent=0
    _
  %s8 = ssub.s32 1, %s6
  %s9 = scalar_select 0, %s8, %s6
  $region1: #{tpu_custom_call.1} parent=0
    #allocation5 [shape = 'u8[16384]{0}', space=vmem, size = 0x4000, scoped, tag = 'input window, operand 3, single buffered']
    #allocation6 [shape = 's32[2]{0}', space=sflag, size = 0x8, scoped, tag = 'scoped memory for tpu_custom_call.1']
    #allocation7 [shape = 's32[2]{0}', space=sflag, size = 0x8, scoped, tag = 'scoped memory for tpu_custom_call.1']
    #allocation8 [shape = 'u8[16384]{0}', space=vmem, size = 0x4000, scoped, tag = 'output window, operand 0']
    %10 = vsyncpa [#allocation6], 0
    %11 = vsyncpa [#allocation7], 0
    %s12 = scalar_lea.sflag [#allocation7], 1
    %13 = vsyncpa %s12, 0
    loop: start=0, step=1, limit=4
    $region2: #{tpu_custom_call.1} parent=1 // loop_pre_header
      _
    $region3: #{tpu_custom_call.1} parent=1 // loop_header
      %s15 = sphi 0, %s19
      %p16 = scmp.ge.s32.totalorder %s15, 4
      %s25 = sphi 0, %s27
      %s28 = sphi 0, %s25
      %s29 = sphi 0, %s28
      %s45 = sphi 0, %s29
      %s51 = sphi 0, %s53
      %s54 = sphi 0, %s51
      %s55 = sphi 0, %s54
      %s71 = sphi 0, %s55
      %s75 = sphi 0, %s75
      %s77 = sphi 0, %s75
      %s78 = sphi 0, %s77
      %s92 = sphi 0, %s78
      %s96 = sphi 0, %s96
      %s98 = sphi 0, %s96
      %s99 = sphi 0, %s98
      %s113 = sphi 0, %s99
      %s117 = sphi 0, %s117
      %s119 = sphi 0, %s117
      %s120 = sphi 0, %s119
      %s134 = sphi 0, %s120
      %s140 = sphi 0, %s142
      %s143 = sphi 0, %s140
      %s144 = sphi 0, %s143
      %s160 = sphi 0, %s144
    $region4: #{tpu_custom_call.1} parent=1 // loop_header_branch
      %18 = sbr.rel (%p16) target = $region8
    $region5: #{tpu_custom_call.1} parent=1 // loop_body
      %s20 = ssub.s32 %s15, 1
      %s21 = ssub.s32 %s15, 2
      %s22 = sadd.s32 %s15, 1
      %s23 = ssub.s32 %s15, %s22
      %p24 = scmp.eq.s32.totalorder %s23, 0
      %s26 = sadd.s32 %s25, 1
      %s27 = scalar_select %p24, %s25, %s26
      %p30 = pneg %p24
      %p31 = scmp.eq.s32.totalorder %s15, 1
      %p32 = por %p30, %p31
      %p33 = scmp.ne.s32.totalorder %s25, %s28
      %p34 = scmp.eq.s32.totalorder %s15, 0
      %p35 = por %p33, %p34
      %p36 = scmp.ne.s32.totalorder %s25, %s28
      %p37 = scmp.eq.s32.totalorder %s20, 1
      %p38 = por %p36, %p37
      %p39 = scmp.ne.s32.totalorder %s28, %s29
      %p40 = scmp.eq.s32.totalorder %s20, 0
      %p41 = por %p39, %p40
      %p42 = scmp.ne.s32.totalorder %s28, %s29
      %p43 = scmp.eq.s32.totalorder %s21, 1
      %p44 = por %p42, %p43
      %p46 = scmp.ne.s32.totalorder %s29, %s45
      %p47 = scmp.eq.s32.totalorder %s21, 0
      %p48 = por %p46, %p47
      %s49 = ssub.s32 %s15, %s22
      %p50 = scmp.eq.s32.totalorder %s49, 0
      %s52 = sadd.s32 %s51, 1
      %s53 = scalar_select %p50, %s51, %s52
      %p56 = pneg %p50
      %p57 = scmp.eq.s32.totalorder %s15, 1
      %p58 = por %p56, %p57
      %p59 = scmp.ne.s32.totalorder %s51, %s54
      %p60 = scmp.eq.s32.totalorder %s15, 0
      %p61 = por %p59, %p60
      %p62 = scmp.ne.s32.totalorder %s51, %s54
      %p63 = scmp.eq.s32.totalorder %s20, 1
      %p64 = por %p62, %p63
      %p65 = scmp.ne.s32.totalorder %s54, %s55
      %p66 = scmp.eq.s32.totalorder %s20, 0
      %p67 = por %p65, %p66
      %p68 = scmp.ne.s32.totalorder %s54, %s55
      %p69 = scmp.eq.s32.totalorder %s21, 1
      %p70 = por %p68, %p69
      %p72 = scmp.ne.s32.totalorder %s55, %s71
      %p73 = scmp.eq.s32.totalorder %s21, 0
      %p74 = por %p72, %p73
      %s76 = sadd.s32 %s75, 1
      %p79 = scmp.eq.s32.totalorder %s15, 1
      %p80 = scmp.ne.s32.totalorder %s75, %s77
      %p81 = scmp.eq.s32.totalorder %s15, 0
      %p82 = por %p80, %p81
      %p83 = scmp.ne.s32.totalorder %s75, %s77
      %p84 = scmp.eq.s32.totalorder %s20, 1
      %p85 = por %p83, %p84
      %p86 = scmp.ne.s32.totalorder %s77, %s78
      %p87 = scmp.eq.s32.totalorder %s20, 0
      %p88 = por %p86, %p87
      %p89 = scmp.ne.s32.totalorder %s77, %s78
      %p90 = scmp.eq.s32.totalorder %s21, 1
      %p91 = por %p89, %p90
      %p93 = scmp.ne.s32.totalorder %s78, %s92
      %p94 = scmp.eq.s32.totalorder %s21, 0
      %p95 = por %p93, %p94
      %s97 = sadd.s32 %s96, 1
      %p100 = scmp.eq.s32.totalorder %s15, 1
      %p101 = scmp.ne.s32.totalorder %s96, %s98
      %p102 = scmp.eq.s32.totalorder %s15, 0
      %p103 = por %p101, %p102
      %p104 = scmp.ne.s32.totalorder %s96, %s98
      %p105 = scmp.eq.s32.totalorder %s20, 1
      %p106 = por %p104, %p105
      %p107 = scmp.ne.s32.totalorder %s98, %s99
      %p108 = scmp.eq.s32.totalorder %s20, 0
      %p109 = por %p107, %p108
      %p110 = scmp.ne.s32.totalorder %s98, %s99
      %p111 = scmp.eq.s32.totalorder %s21, 1
      %p112 = por %p110, %p111
      %p114 = scmp.ne.s32.totalorder %s99, %s113
      %p115 = scmp.eq.s32.totalorder %s21, 0
      %p116 = por %p114, %p115
      %s118 = sadd.s32 %s117, 1
      %p121 = scmp.eq.s32.totalorder %s15, 1
      %p122 = scmp.ne.s32.totalorder %s117, %s119
      %p123 = scmp.eq.s32.totalorder %s15, 0
      %p124 = por %p122, %p123
      %p125 = scmp.ne.s32.totalorder %s117, %s119
      %p126 = scmp.eq.s32.totalorder %s20, 1
      %p127 = por %p125, %p126
      %p128 = scmp.ne.s32.totalorder %s119, %s120
      %p129 = scmp.eq.s32.totalorder %s20, 0
      %p130 = por %p128, %p129
      %p131 = scmp.ne.s32.totalorder %s119, %s120
      %p132 = scmp.eq.s32.totalorder %s21, 1
      %p133 = por %p131, %p132
      %p135 = scmp.ne.s32.totalorder %s120, %s134
      %p136 = scmp.eq.s32.totalorder %s21, 0
      %p137 = por %p135, %p136
      %s138 = ssub.s32 %s15, %s22
      %p139 = scmp.eq.s32.totalorder %s138, 0
      %s141 = sadd.s32 %s140, 1
      %s142 = scalar_select %p139, %s140, %s141
      %p145 = pneg %p139
      %p146 = scmp.eq.s32.totalorder %s15, 1
      %p147 = por %p145, %p146
      %p148 = scmp.ne.s32.totalorder %s140, %s143
      %p149 = scmp.eq.s32.totalorder %s15, 0
      %p150 = por %p148, %p149
      %p151 = scmp.ne.s32.totalorder %s140, %s143
      %p152 = scmp.eq.s32.totalorder %s20, 1
      %p153 = por %p151, %p152
      %p154 = scmp.ne.s32.totalorder %s143, %s144
      %p155 = scmp.eq.s32.totalorder %s20, 0
      %p156 = por %p154, %p155
      %p157 = scmp.ne.s32.totalorder %s143, %s144
      %p158 = scmp.eq.s32.totalorder %s21, 1
      %p159 = por %p157, %p158
      %p161 = scmp.ne.s32.totalorder %s144, %s160
      %p162 = scmp.eq.s32.totalorder %s21, 0
      %p163 = por %p161, %p162
      %p164 = scmp.le.s32.totalorder 1, %s15
      %p165 = scmp.lt.s32.totalorder %s15, 3
      %p166 = pnand %p164, %p165
      %p167 = pneg %p166
      // Predicated region
      $region9: #{tpu_custom_call.1} parent=5 // pred_check
        _
      $region10: #{tpu_custom_call.1} parent=5 // pred_check_branch
        %169 = sbr.rel (%p166) target = $region12
      $region11: #{tpu_custom_call.1} parent=5 // pred_region
        %s170 = ssub.s32 %s15, 1
        // Predicated region
        $region13: #{tpu_custom_call.1} parent=11 // pred_check
          %p171 = pneg %p88
        $region14: #{tpu_custom_call.1} parent=11 // pred_check_branch
          %173 = sbr.rel (%p171) target = $region16
        $region15: #{tpu_custom_call.1} parent=11 // pred_region
          _
        $region16: #{tpu_custom_call.1} parent=11 // pred_fallthru
          _
        // Predicated region
        $region17: #{tpu_custom_call.1} parent=11 // pred_check
          %p174 = pneg %p109
        $region18: #{tpu_custom_call.1} parent=11 // pred_check_branch
          %176 = sbr.rel (%p174) target = $region20
        $region19: #{tpu_custom_call.1} parent=11 // pred_region
          %s178 = ssub.s32 512, 512
          %179 = vsyncadd [#allocation6], %s178
          %s180 = sshll.u32 [#allocation5], 4
          %s181 = int_to_ptr.vmem [resolvable:$true] %s180
          %186 = dma.hbm_to_vmem [thread:$0]  %s3, 512, %s181, [#allocation6], 128, 128, 8
        $region20: #{tpu_custom_call.1} parent=11 // pred_fallthru
          _
        // Predicated region
        $region21: #{tpu_custom_call.1} parent=11 // pred_check
          %p187 = pneg %p130
        $region22: #{tpu_custom_call.1} parent=11 // pred_check_branch
          %189 = sbr.rel (%p187) target = $region24
        $region23: #{tpu_custom_call.1} parent=11 // pred_region
          _
        $region24: #{tpu_custom_call.1} parent=11 // pred_fallthru
          _
      $region12: #{tpu_custom_call.1} parent=5 // pred_fallthru
        _
      %p190 = scmp.lt.s32.totalorder %s15, 2
      // Predicated region
      $region25: #{tpu_custom_call.1} parent=5 // pred_check
        %p191 = pneg %p190
      $region26: #{tpu_custom_call.1} parent=5 // pred_check_branch
        %193 = sbr.rel (%p191) target = $region28
      $region27: #{tpu_custom_call.1} parent=5 // pred_region
        // Predicated region
        $region29: #{tpu_custom_call.1} parent=27 // pred_check
          %p194 = pneg %p35
        $region30: #{tpu_custom_call.1} parent=27 // pred_check_branch
          %196 = sbr.rel (%p194) target = $region32
        $region31: #{tpu_custom_call.1} parent=27 // pred_region
          %s197 = smul.u32 2, %s15
          %p198 = scmp.lt.s32.totalorder %s197, 3
          %s199 = scalar_select %p198, %s197, 3
          %s200 = smul.addr %s199, 8
          %s201 = scalar_lea.vmem %s0, %s200
          %s202 = smul.u32 2, %s15
        $region32: #{tpu_custom_call.1} parent=27 // pred_fallthru
          _
        // Predicated region
        $region33: #{tpu_custom_call.1} parent=27 // pred_check
          %p203 = pneg %p61
        $region34: #{tpu_custom_call.1} parent=27 // pred_check_branch
          %205 = sbr.rel (%p203) target = $region36
        $region35: #{tpu_custom_call.1} parent=27 // pred_region
          %s206 = smul.u32 4, %s15
          %p207 = scmp.lt.s32.totalorder %s206, 7
          %s208 = scalar_select %p207, %s206, 7
          %s209 = smul.addr %s208, 8
          %s210 = scalar_lea.vmem %s1, %s209
          %s211 = smul.u32 4, %s15
        $region36: #{tpu_custom_call.1} parent=27 // pred_fallthru
          _
      $region28: #{tpu_custom_call.1} parent=5 // pred_fallthru
        _
      %p212 = scmp.le.s32.totalorder 1, %s15
      %p213 = scmp.lt.s32.totalorder %s15, 3
      %p214 = pnand %p212, %p213
      %p215 = pneg %p214
      // Predicated region
      $region37: #{tpu_custom_call.1} parent=5 // pred_check
        _
      $region38: #{tpu_custom_call.1} parent=5 // pred_check_branch
        %217 = sbr.rel (%p214) target = $region40
      $region39: #{tpu_custom_call.1} parent=5 // pred_region
        %s218 = ssub.s32 %s15, 1
        // Predicated region
        $region41: #{tpu_custom_call.1} parent=39 // pred_check
          %p219 = pneg %p109
        $region42: #{tpu_custom_call.1} parent=39 // pred_check_branch
          %221 = sbr.rel (%p219) target = $region44
        $region43: #{tpu_custom_call.1} parent=39 // pred_region
          %222 = dma.done [#allocation6], 512
        $region44: #{tpu_custom_call.1} parent=39 // pred_fallthru
          _
        %s223 = smul.u32 2, %s20
        %p224 = scmp.lt.s32.totalorder %s223, 3
        %s225 = scalar_select %p224, %s223, 3
        %s226 = smul.addr %s225, 8
        %s227 = scalar_lea.vmem %s0, %s226
        %p228 = pneg %p41
        %p229 = pneg %p38
        %s230 = smul.u32 4, %s20
        %p231 = scmp.lt.s32.totalorder %s230, 7
        %s232 = scalar_select %p231, %s230, 7
        %s233 = smul.addr %s232, 8
        %s234 = scalar_lea.vmem %s1, %s233
        %p235 = pneg %p67
        %p236 = pneg %p64
        %p237 = pneg %p88
        %p238 = pneg %p85
        %p239 = pneg %p109
        %p240 = pneg %p106
        %p241 = pneg %p130
        %p242 = pneg %p127
        %p243 = pneg %p156
        %p244 = pneg %p153
        %s245 = sand.u32 %s143, 1
        %s246 = scalar_lea.sflag [#allocation7], %s245
        %s247 = sand.u32 %s143, 1
        %s248 = smul.addr %s247, 16
        %s249 = scalar_lea.vmem [#allocation8], %s248
        %s250 = smul.u32 2, %s20
        %p251 = scmp.lt.s32.totalorder %s250, 3
        %s252 = scalar_select %p251, %s250, 3
        %s253 = smul.addr %s252, 8
        %s254 = scalar_lea.vmem %s0, %s253
        %s255 = smul.u32 2, %s20
        %s256 = smul.u32 4, %s20
        %p257 = scmp.lt.s32.totalorder %s256, 7
        %s258 = scalar_select %p257, %s256, 7
        %s259 = smul.addr %s258, 8
        %s260 = scalar_lea.vmem %s1, %s259
        %s261 = smul.u32 4, %s20
        %s262 = smul.u32 2, %s20
        %v263 = vld [vmem:[%s254] sm:$0xff]
        %v264 = vld [vmem:[%s254 + $0x8] sm:$0xff]
        %v265 = vld [vmem:[%s260] sm:$0xff]
        %v266 = vld [vmem:[%s260 + $0x8] sm:$0xff]
        %v267 = vld [vmem:[%s260 + $0x10] sm:$0xff]
        %v268 = vld [vmem:[%s260 + $0x18] sm:$0xff]
        %v269 = vld [vmem:[%s2] sm:$0xff]
        %v270 = vld [vmem:[%s2 + $0x8] sm:$0xff]
        %vm271 = vcmask 130048
        %v273 = vsel %vm271, %v263, 0
        %v276 = vsel %vm271, %v264, 0
        %278 = vmatprep.subr.mxu0 0.0
        %279 = vmatpush1.msra.mxu0 %v269
        %280 = vmatprep.subr.mxu0 0.0
        %281 = vmatpush1.msra.mxu0 %v270
        %282 = vmatprep.subr.mxu0 0.0
        %283 = vmatpush1.msra.mxu0 0.0
        %284 = vmatprep.subr.mxu0 0.0
        %285 = vmatpush1.msra.mxu0 0.0
        %286 = vmatprep.subr.mxu0 0.0
        %287 = vmatpush1.msra.mxu0 0.0
        %288 = vmatprep.subr.mxu0 0.0
        %289 = vmatpush1.msra.mxu0 0.0
        %290 = vmatprep.subr.mxu0 0.0
        %291 = vmatpush1.msra.mxu0 0.0
        %292 = vmatprep.subr.mxu0 0.0
        %293 = vmatpush1.msra.mxu0 0.0
        %294 = vmatprep.subr.mxu0 0.0
        %295 = vmatpush1.msra.mxu0 0.0
        %296 = vmatprep.subr.mxu0 0.0
        %297 = vmatpush1.msra.mxu0 0.0
        %298 = vmatprep.subr.mxu0 0.0
        %299 = vmatpush1.msra.mxu0 0.0
        %300 = vmatprep.subr.mxu0 0.0
        %301 = vmatpush1.msra.mxu0 0.0
        %302 = vmatprep.subr.mxu0 0.0
        %303 = vmatpush1.msra.mxu0 0.0
        %304 = vmatprep.subr.mxu0 0.0
        %305 = vmatpush1.msra.mxu0 0.0
        %306 = vmatprep.subr.mxu0 0.0
        %307 = vmatpush1.msra.mxu0 0.0
        %308 = vmatprep.subr.mxu0 0.0
        %309 = vmatpush1.msra.mxu0 0.0
        %310 = vmatprep.subr.mxu0 0.0
        %311 = vmatpush1.msra.mxu0 0.0
        %312 = vmatprep.subr.mxu0 0.0
        %313 = vmatpush1.msra.mxu0 0.0
        %314 = vmatprep.subr.mxu0 0.0
        %315 = vmatpush1.msra.mxu0 0.0
        %316 = vmatprep.subr.mxu0 0.0
        %317 = vmatpush1.msra.mxu0 0.0
        %318 = vmatprep.subr.mxu0 0.0
        %319 = vmatpush1.msra.mxu0 0.0
        %320 = vmatprep.subr.mxu0 0.0
        %321 = vmatpush1.msra.mxu0 0.0
        %322 = vmatprep.subr.mxu0 0.0
        %323 = vmatpush1.msra.mxu0 0.0
        %324 = vmatprep.subr.mxu0 0.0
        %325 = vmatpush1.msra.mxu0 0.0
        %326 = vmatprep.subr.mxu0 0.0
        %327 = vmatpush1.msra.mxu0 0.0
        %328 = vmatprep.subr.mxu0 0.0
        %329 = vmatpush1.msra.mxu0 0.0
        %330 = vmatprep.subr.mxu0 0.0
        %331 = vmatpush1.msra.mxu0 0.0
        %332 = vmatprep.subr.mxu0 0.0
        %333 = vmatpush1.msra.mxu0 0.0
        %334 = vmatprep.subr.mxu0 0.0
        %335 = vmatpush1.msra.mxu0 0.0
        %336 = vmatprep.subr.mxu0 0.0
        %337 = vmatpush1.msra.mxu0 0.0
        %338 = vmatprep.subr.mxu0 0.0
        %339 = vmatpush1.msra.mxu0 0.0
        %340 = vmatprep.subr.mxu0 0.0
        %341 = vmatpush1.msra.mxu0 0.0
        %342 = vmatprep.mubr.f32.mxu0 0.0
        %343 = vmatmul.mubr.f32.gmra.mrb[0].mxu0 %v273
        %v344 = vpop.f32.mrb[0].mxu0
        %v345 = vadd.f32 0.0, %v344
        %v346 = vpop.f32.mrb[0].mxu0
        %347 = vmatprep.mubr.f32.mxu0 0.0
        %348 = vmatmul.mubr.f32.gmra.mrb[0].mxu0 %v276
        %v349 = vpop.f32.mrb[0].mxu0
        %v350 = vadd.f32 0.0, %v349
        %v351 = vpop.f32.mrb[0].mxu0
        %352 = vdwg.mxu0
        %v353 = vld [vmem:[#allocation5] sm:$0xff]
        %v354 = vld [vmem:[#allocation5 + $0x8] sm:$0xff]
        %v355 = vld [vmem:[#allocation5 + $0x10] sm:$0xff]
        %v356 = vld [vmem:[#allocation5 + $0x18] sm:$0xff]
        %vm357 = vcmask 261120
        %v359 = vsel %vm357, %v265, 0
        %v362 = vsel %vm357, %v266, 0
        %v365 = vsel %vm357, %v267, 0
        %v368 = vsel %vm357, %v268, 0
        %370 = vmatprep.subr.mxu0 0.0
        %371 = vmatpush1.msra.mxu0 %v353
        %372 = vmatprep.subr.mxu0 0.0
        %373 = vmatpush1.msra.mxu0 %v354
        %374 = vmatprep.subr.mxu0 0.0
        %375 = vmatpush1.msra.mxu0 %v355
        %376 = vmatprep.subr.mxu0 0.0
        %377 = vmatpush1.msra.mxu0 %v356
        %378 = vmatprep.subr.mxu0 0.0
        %379 = vmatpush1.msra.mxu0 0.0
        %380 = vmatprep.subr.mxu0 0.0
        %381 = vmatpush1.msra.mxu0 0.0
        %382 = vmatprep.subr.mxu0 0.0
        %383 = vmatpush1.msra.mxu0 0.0
        %384 = vmatprep.subr.mxu0 0.0
        %385 = vmatpush1.msra.mxu0 0.0
        %386 = vmatprep.subr.mxu0 0.0
        %387 = vmatpush1.msra.mxu0 0.0
        %388 = vmatprep.subr.mxu0 0.0
        %389 = vmatpush1.msra.mxu0 0.0
        %390 = vmatprep.subr.mxu0 0.0
        %391 = vmatpush1.msra.mxu0 0.0
        %392 = vmatprep.subr.mxu0 0.0
        %393 = vmatpush1.msra.mxu0 0.0
        %394 = vmatprep.subr.mxu0 0.0
        %395 = vmatpush1.msra.mxu0 0.0
        %396 = vmatprep.subr.mxu0 0.0
        %397 = vmatpush1.msra.mxu0 0.0
        %398 = vmatprep.subr.mxu0 0.0
        %399 = vmatpush1.msra.mxu0 0.0
        %400 = vmatprep.subr.mxu0 0.0
        %401 = vmatpush1.msra.mxu0 0.0
        %402 = vmatprep.subr.mxu0 0.0
        %403 = vmatpush1.msra.mxu0 0.0
        %404 = vmatprep.subr.mxu0 0.0
        %405 = vmatpush1.msra.mxu0 0.0
        %406 = vmatprep.subr.mxu0 0.0
        %407 = vmatpush1.msra.mxu0 0.0
        %408 = vmatprep.subr.mxu0 0.0
        %409 = vmatpush1.msra.mxu0 0.0
        %410 = vmatprep.subr.mxu0 0.0
        %411 = vmatpush1.msra.mxu0 0.0
        %412 = vmatprep.subr.mxu0 0.0
        %413 = vmatpush1.msra.mxu0 0.0
        %414 = vmatprep.subr.mxu0 0.0
        %415 = vmatpush1.msra.mxu0 0.0
        %416 = vmatprep.subr.mxu0 0.0
        %417 = vmatpush1.msra.mxu0 0.0
        %418 = vmatprep.subr.mxu0 0.0
        %419 = vmatpush1.msra.mxu0 0.0
        %420 = vmatprep.subr.mxu0 0.0
        %421 = vmatpush1.msra.mxu0 0.0
        %422 = vmatprep.subr.mxu0 0.0
        %423 = vmatpush1.msra.mxu0 0.0
        %424 = vmatprep.subr.mxu0 0.0
        %425 = vmatpush1.msra.mxu0 0.0
        %426 = vmatprep.subr.mxu0 0.0
        %427 = vmatpush1.msra.mxu0 0.0
        %428 = vmatprep.subr.mxu0 0.0
        %429 = vmatpush1.msra.mxu0 0.0
        %430 = vmatprep.subr.mxu0 0.0
        %431 = vmatpush1.msra.mxu0 0.0
        %432 = vmatprep.subr.mxu0 0.0
        %433 = vmatpush1.msra.mxu0 0.0
        %434 = vmatprep.mubr.f32.mxu0 0.0
        %435 = vmatmul.mubr.f32.gmra.mrb[0].mxu0 %v359
        %v436 = vpop.f32.mrb[0].mxu0
        %v437 = vadd.f32 0.0, %v436
        %v438 = vpop.f32.mrb[0].mxu0
        %439 = vmatprep.mubr.f32.mxu0 0.0
        %440 = vmatmul.mubr.f32.gmra.mrb[0].mxu0 %v362
        %v441 = vpop.f32.mrb[0].mxu0
        %v442 = vadd.f32 0.0, %v441
        %v443 = vpop.f32.mrb[0].mxu0
        %444 = vmatprep.mubr.f32.mxu0 0.0
        %445 = vmatmul.mubr.f32.gmra.mrb[0].mxu0 %v365
        %v446 = vpop.f32.mrb[0].mxu0
        %v447 = vadd.f32 0.0, %v446
        %v448 = vpop.f32.mrb[0].mxu0
        %449 = vmatprep.mubr.f32.mxu0 0.0
        %450 = vmatmul.mubr.f32.gmra.mrb[0].mxu0 %v368
        %v451 = vpop.f32.mrb[0].mxu0
        %v452 = vadd.f32 0.0, %v451
        %v453 = vpop.f32.mrb[0].mxu0
        %454 = vdwg.mxu0
        %v455 = vld [vmem:[%s4] sm:$0xff]
        %v456 = vld [vmem:[%s4 + $0x8] sm:$0xff]
        %v457 = vld [vmem:[%s4 + $0x10] sm:$0xff]
        %v458 = vld [vmem:[%s4 + $0x18] sm:$0xff]
        %v459 = vld [vmem:[%s4 + $0x20] sm:$0xff]
        %v460 = vld [vmem:[%s4 + $0x28] sm:$0xff]
        %v461 = vld [vmem:[%s4 + $0x30] sm:$0xff]
        %v462 = vld [vmem:[%s4 + $0x38] sm:$0xff]
        %v463 = vld [vmem:[%s4 + $0x40] sm:$0xff]
        %v464 = vld [vmem:[%s4 + $0x48] sm:$0xff]
        %v465 = vld [vmem:[%s4 + $0x50] sm:$0xff]
        %v466 = vld [vmem:[%s4 + $0x58] sm:$0xff]
        %v467 = vld [vmem:[%s4 + $0x60] sm:$0xff]
        %v468 = vld [vmem:[%s4 + $0x68] sm:$0xff]
        %v469 = vld [vmem:[%s4 + $0x70] sm:$0xff]
        %v470 = vld [vmem:[%s4 + $0x78] sm:$0xff]
        %471 = vmatprep.subr.mxu0 0.0
        %472 = vmatpush1.msra.mxu0 %v455
        %473 = vmatprep.subr.mxu0 0.0
        %474 = vmatpush1.msra.mxu0 %v456
        %475 = vmatprep.subr.mxu0 0.0
        %476 = vmatpush1.msra.mxu0 %v457
        %477 = vmatprep.subr.mxu0 0.0
        %478 = vmatpush1.msra.mxu0 %v458
        %479 = vmatprep.subr.mxu0 0.0
        %480 = vmatpush1.msra.mxu0 %v459
        %481 = vmatprep.subr.mxu0 0.0
        %482 = vmatpush1.msra.mxu0 %v460
        %483 = vmatprep.subr.mxu0 0.0
        %484 = vmatpush1.msra.mxu0 %v461
        %485 = vmatprep.subr.mxu0 0.0
        %486 = vmatpush1.msra.mxu0 %v462
        %487 = vmatprep.subr.mxu0 0.0
        %488 = vmatpush1.msra.mxu0 %v463
        %489 = vmatprep.subr.mxu0 0.0
        %490 = vmatpush1.msra.mxu0 %v464
        %491 = vmatprep.subr.mxu0 0.0
        %492 = vmatpush1.msra.mxu0 %v465
        %493 = vmatprep.subr.mxu0 0.0
        %494 = vmatpush1.msra.mxu0 %v466
        %495 = vmatprep.subr.mxu0 0.0
        %496 = vmatpush1.msra.mxu0 %v467
        %497 = vmatprep.subr.mxu0 0.0
        %498 = vmatpush1.msra.mxu0 %v468
        %499 = vmatprep.subr.mxu0 0.0
        %500 = vmatpush1.msra.mxu0 %v469
        %501 = vmatprep.subr.mxu0 0.0
        %502 = vmatpush1.msra.mxu0 %v470
        %503 = vmatprep.subr.mxu0 0.0
        %504 = vmatpush1.msra.mxu0 0.0
        %505 = vmatprep.subr.mxu0 0.0
        %506 = vmatpush1.msra.mxu0 0.0
        %507 = vmatprep.subr.mxu0 0.0
        %508 = vmatpush1.msra.mxu0 0.0
        %509 = vmatprep.subr.mxu0 0.0
        %510 = vmatpush1.msra.mxu0 0.0
        %511 = vmatprep.subr.mxu0 0.0
        %512 = vmatpush1.msra.mxu0 0.0
        %513 = vmatprep.subr.mxu0 0.0
        %514 = vmatpush1.msra.mxu0 0.0
        %515 = vmatprep.subr.mxu0 0.0
        %516 = vmatpush1.msra.mxu0 0.0
        %517 = vmatprep.subr.mxu0 0.0
        %518 = vmatpush1.msra.mxu0 0.0
        %519 = vmatprep.subr.mxu0 0.0
        %520 = vmatpush1.msra.mxu0 0.0
        %521 = vmatprep.subr.mxu0 0.0
        %522 = vmatpush1.msra.mxu0 0.0
        %523 = vmatprep.subr.mxu0 0.0
        %524 = vmatpush1.msra.mxu0 0.0
        %525 = vmatprep.subr.mxu0 0.0
        %526 = vmatpush1.msra.mxu0 0.0
        %527 = vmatprep.subr.mxu0 0.0
        %528 = vmatpush1.msra.mxu0 0.0
        %529 = vmatprep.subr.mxu0 0.0
        %530 = vmatpush1.msra.mxu0 0.0
        %531 = vmatprep.subr.mxu0 0.0
        %532 = vmatpush1.msra.mxu0 0.0
        %533 = vmatprep.subr.mxu0 0.0
        %534 = vmatpush1.msra.mxu0 0.0
        %535 = vmatprep.mubr.f32.mxu0 0.0
        %536 = vmatmul.mubr.f32.gmra.mrb[0].mxu0 %v437
        %v537 = vpop.f32.mrb[0].mxu0
        %v538 = vadd.f32 0.0, %v537
        %v539 = vpop.f32.mrb[0].mxu0
        %540 = vmatprep.mubr.f32.mxu0 0.0
        %541 = vmatmul.mubr.f32.gmra.mrb[0].mxu0 %v442
        %v542 = vpop.f32.mrb[0].mxu0
        %v543 = vadd.f32 0.0, %v542
        %v544 = vpop.f32.mrb[0].mxu0
        %545 = vmatprep.mubr.f32.mxu0 0.0
        %546 = vmatmul.mubr.f32.gmra.mrb[0].mxu0 %v447
        %v547 = vpop.f32.mrb[0].mxu0
        %v548 = vadd.f32 0.0, %v547
        %v549 = vpop.f32.mrb[0].mxu0
        %550 = vmatprep.mubr.f32.mxu0 0.0
        %551 = vmatmul.mubr.f32.gmra.mrb[0].mxu0 %v452
        %v552 = vpop.f32.mrb[0].mxu0
        %v553 = vadd.f32 0.0, %v552
        %v554 = vpop.f32.mrb[0].mxu0
        %555 = vdwg.mxu0
        %556 = vst [vmem:[#allocation2] sm:$0xff] %v345
        %557 = vst [vmem:[#allocation2 + $0x8] sm:$0xff] %v350
        %558 = vst [vmem:[#allocation3] sm:$0xff] %v437
        %559 = vst [vmem:[#allocation3 + $0x8] sm:$0xff] %v442
        %560 = vst [vmem:[#allocation3 + $0x10] sm:$0xff] %v447
        %561 = vst [vmem:[#allocation3 + $0x18] sm:$0xff] %v452
        %562 = vst [vmem:[#allocation4] sm:$0xff] %v538
        %563 = vst [vmem:[#allocation4 + $0x8] sm:$0xff] %v543
        %564 = vst [vmem:[#allocation4 + $0x10] sm:$0xff] %v548
        %565 = vst [vmem:[#allocation4 + $0x18] sm:$0xff] %v553
        loop: start=0, step=1, limit=2
        $region45: #{tpu_custom_call.1} parent=39 // loop_pre_header
          _
        $region46: #{tpu_custom_call.1} parent=39 // loop_header
          %s567 = sphi 0, %s571
          %p568 = scmp.ge.s32.totalorder %s567, 2
        $region47: #{tpu_custom_call.1} parent=39 // loop_header_branch
          %570 = sbr.rel (%p568) target = $region51
        $region48: #{tpu_custom_call.1} parent=39 // loop_body
          %s572 = smul.u32 %s567, 8
          %s573 = smul.u32 %s567, 16
          %s574 = scalar_lea.vmem [#allocation2], %s572
          %v575 = vld [vmem:[%s574] sm:$0xff]
          %s576 = scalar_lea.vmem [#allocation3], %s573
          %v577 = vld [vmem:[%s576] sm:$0xff]
          %v578 = vld [vmem:[%s576 + $0x8] sm:$0xff]
          %s579 = scalar_lea.vmem [#allocation4], %s573
          %v580 = vld [vmem:[%s579] sm:$0xff]
          %v581 = vld [vmem:[%s579 + $0x8] sm:$0xff]
          %582 = vmatprep.subr.mxu0 0.0
          %583 = vmatpush1.xpose.msra.mxu0 %v577
          %584 = vmatprep.subr.mxu0 0.0
          %585 = vmatpush1.xpose.msra.mxu0 %v578
          %586 = vmatprep.subr.mxu0 0.0
          %587 = vmatpush1.xpose.msra.mxu0 0.0
          %588 = vmatprep.subr.mxu0 0.0
          %589 = vmatpush1.xpose.msra.mxu0 0.0
          %590 = vmatprep.subr.mxu0 0.0
          %591 = vmatpush1.xpose.msra.mxu0 0.0
          %592 = vmatprep.subr.mxu0 0.0
          %593 = vmatpush1.xpose.msra.mxu0 0.0
          %594 = vmatprep.subr.mxu0 0.0
          %595 = vmatpush1.xpose.msra.mxu0 0.0
          %596 = vmatprep.subr.mxu0 0.0
          %597 = vmatpush1.xpose.msra.mxu0 0.0
          %598 = vmatprep.subr.mxu0 0.0
          %599 = vmatpush1.xpose.msra.mxu0 0.0
          %600 = vmatprep.subr.mxu0 0.0
          %601 = vmatpush1.xpose.msra.mxu0 0.0
          %602 = vmatprep.subr.mxu0 0.0
          %603 = vmatpush1.xpose.msra.mxu0 0.0
          %604 = vmatprep.subr.mxu0 0.0
          %605 = vmatpush1.xpose.msra.mxu0 0.0
          %606 = vmatprep.subr.mxu0 0.0
          %607 = vmatpush1.xpose.msra.mxu0 0.0
          %608 = vmatprep.subr.mxu0 0.0
          %609 = vmatpush1.xpose.msra.mxu0 0.0
          %610 = vmatprep.subr.mxu0 0.0
          %611 = vmatpush1.xpose.msra.mxu0 0.0
          %612 = vmatprep.subr.mxu0 0.0
          %613 = vmatpush1.xpose.msra.mxu0 0.0
          %614 = vmatprep.subr.mxu0 0.0
          %615 = vmatpush1.xpose.msra.mxu0 0.0
          %616 = vmatprep.subr.mxu0 0.0
          %617 = vmatpush1.xpose.msra.mxu0 0.0
          %618 = vmatprep.subr.mxu0 0.0
          %619 = vmatpush1.xpose.msra.mxu0 0.0
          %620 = vmatprep.subr.mxu0 0.0
          %621 = vmatpush1.xpose.msra.mxu0 0.0
          %622 = vmatprep.subr.mxu0 0.0
          %623 = vmatpush1.xpose.msra.mxu0 0.0
          %624 = vmatprep.subr.mxu0 0.0
          %625 = vmatpush1.xpose.msra.mxu0 0.0
          %626 = vmatprep.subr.mxu0 0.0
          %627 = vmatpush1.xpose.msra.mxu0 0.0
          %628 = vmatprep.subr.mxu0 0.0
          %629 = vmatpush1.xpose.msra.mxu0 0.0
          %630 = vmatprep.subr.mxu0 0.0
          %631 = vmatpush1.xpose.msra.mxu0 0.0
          %632 = vmatprep.subr.mxu0 0.0
          %633 = vmatpush1.xpose.msra.mxu0 0.0
          %634 = vmatprep.subr.mxu0 0.0
          %635 = vmatpush1.xpose.msra.mxu0 0.0
          %636 = vmatprep.subr.mxu0 0.0
          %637 = vmatpush1.xpose.msra.mxu0 0.0
          %638 = vmatprep.subr.mxu0 0.0
          %639 = vmatpush1.xpose.msra.mxu0 0.0
          %640 = vmatprep.subr.mxu0 0.0
          %641 = vmatpush1.xpose.msra.mxu0 0.0
          %642 = vmatprep.subr.mxu0 0.0
          %643 = vmatpush1.xpose.msra.mxu0 0.0
          %644 = vmatprep.subr.mxu0 0.0
          %645 = vmatpush1.xpose.msra.mxu0 0.0
          %646 = vmatprep.mubr.f32.mxu0 0.0
          %647 = vmatmul.mubr.f32.gmra.mrb[0].mxu0 %v575
          %v648 = vpop.f32.mrb[0].mxu0
          %v649 = vadd.f32 0.0, %v648
          %v650 = vpop.f32.mrb[0].mxu0
          %651 = vdwg.mxu0
          %v652 = vsel %vm271, %v649, -inf
          %653 = vmax.xlane.f32.xlu0 %v652
          %v654 = vpop.xlane.xlu0 %653
          %v655 = vsub.f32 %v649, %v654
          %v656 = vmul.f32 %v655, 1.442695
          %v657 = vpow.pop %v656
          %v658 = vsel %vm271, %v657, 0.0
          %659 = vadd.xlane.f32.xlu0 %v658
          %v660 = vpop.xlane.xlu0 %659
          %v662 = vsel %vm271, %v657, 0
          %664 = vmatprep.subr.mxu0 0.0
          %665 = vmatpush1.msra.mxu0 %v580
          %666 = vmatprep.subr.mxu0 0.0
          %667 = vmatpush1.msra.mxu0 %v581
          %668 = vmatprep.subr.mxu0 0.0
          %669 = vmatpush1.msra.mxu0 0.0
          %670 = vmatprep.subr.mxu0 0.0
          %671 = vmatpush1.msra.mxu0 0.0
          %672 = vmatprep.subr.mxu0 0.0
          %673 = vmatpush1.msra.mxu0 0.0
          %674 = vmatprep.subr.mxu0 0.0
          %675 = vmatpush1.msra.mxu0 0.0
          %676 = vmatprep.subr.mxu0 0.0
          %677 = vmatpush1.msra.mxu0 0.0
          %678 = vmatprep.subr.mxu0 0.0
          %679 = vmatpush1.msra.mxu0 0.0
          %680 = vmatprep.subr.mxu0 0.0
          %681 = vmatpush1.msra.mxu0 0.0
          %682 = vmatprep.subr.mxu0 0.0
          %683 = vmatpush1.msra.mxu0 0.0
          %684 = vmatprep.subr.mxu0 0.0
          %685 = vmatpush1.msra.mxu0 0.0
          %686 = vmatprep.subr.mxu0 0.0
          %687 = vmatpush1.msra.mxu0 0.0
          %688 = vmatprep.subr.mxu0 0.0
          %689 = vmatpush1.msra.mxu0 0.0
          %690 = vmatprep.subr.mxu0 0.0
          %691 = vmatpush1.msra.mxu0 0.0
          %692 = vmatprep.subr.mxu0 0.0
          %693 = vmatpush1.msra.mxu0 0.0
          %694 = vmatprep.subr.mxu0 0.0
          %695 = vmatpush1.msra.mxu0 0.0
          %696 = vmatprep.subr.mxu0 0.0
          %697 = vmatpush1.msra.mxu0 0.0
          %698 = vmatprep.subr.mxu0 0.0
          %699 = vmatpush1.msra.mxu0 0.0
          %700 = vmatprep.subr.mxu0 0.0
          %701 = vmatpush1.msra.mxu0 0.0
          %702 = vmatprep.subr.mxu0 0.0
          %703 = vmatpush1.msra.mxu0 0.0
          %704 = vmatprep.subr.mxu0 0.0
          %705 = vmatpush1.msra.mxu0 0.0
          %706 = vmatprep.subr.mxu0 0.0
          %707 = vmatpush1.msra.mxu0 0.0
          %708 = vmatprep.subr.mxu0 0.0
          %709 = vmatpush1.msra.mxu0 0.0
          %710 = vmatprep.subr.mxu0 0.0
          %711 = vmatpush1.msra.mxu0 0.0
          %712 = vmatprep.subr.mxu0 0.0
          %713 = vmatpush1.msra.mxu0 0.0
          %714 = vmatprep.subr.mxu0 0.0
          %715 = vmatpush1.msra.mxu0 0.0
          %716 = vmatprep.subr.mxu0 0.0
          %717 = vmatpush1.msra.mxu0 0.0
          %718 = vmatprep.subr.mxu0 0.0
          %719 = vmatpush1.msra.mxu0 0.0
          %720 = vmatprep.subr.mxu0 0.0
          %721 = vmatpush1.msra.mxu0 0.0
          %722 = vmatprep.subr.mxu0 0.0
          %723 = vmatpush1.msra.mxu0 0.0
          %724 = vmatprep.subr.mxu0 0.0
          %725 = vmatpush1.msra.mxu0 0.0
          %726 = vmatprep.subr.mxu0 0.0
          %727 = vmatpush1.msra.mxu0 0.0
          %728 = vmatprep.mubr.f32.mxu0 0.0
          %729 = vmatmul.mubr.f32.gmra.mrb[0].mxu0 %v662
          %v730 = vpop.f32.mrb[0].mxu0
          %v731 = vadd.f32 0.0, %v730
          %v732 = vpop.f32.mrb[0].mxu0
          %733 = vdwg.mxu0
          %v734 = vrcp.pop %v660
          %v735 = vmul.f32 %v731, %v734
          %s736 = scalar_lea.vmem %s249, %s572 [#allocation8]
          %737 = vst [vmem:[%s736] sm:$0xff] %v735
        $region49: #{tpu_custom_call.1} parent=39 // loop_footer
          %s571 = sadd.s32 1, %s567
        $region50: #{tpu_custom_call.1} parent=39 // loop_footer_branch
          %566 = sbr.rel target = $region46
        $region51: #{tpu_custom_call.1} parent=39 // loop_exit
          _
        %s738 = sand.u32 %s143, 1
        %s739 = scalar_lea.sflag [#allocation7], %s738
        %s740 = sand.u32 %s143, 1
        %s741 = smul.addr %s740, 16
        %s742 = scalar_lea.vmem [#allocation8], %s741
        // Predicated region
        $region52: #{tpu_custom_call.1} parent=39 // pred_check
          %p743 = pneg %p153
        $region53: #{tpu_custom_call.1} parent=39 // pred_check_branch
          %745 = sbr.rel (%p743) target = $region55
        $region54: #{tpu_custom_call.1} parent=39 // pred_region
          %s746 = smul.u32 2, %s20
          %s748 = ssub.s32 256, 256
          %749 = vsyncadd %s739, %s748
          %s750 = smul.addr %s746, 128
          %s751 = scalar_lea.hbm %s5, %s750
          %s752 = sshll.u32 %s742, 4
          %s753 = int_to_ptr.vmem [resolvable:$true] %s752
          %758 = dma.vmem_to_hbm [thread:$0]  %s753, 256, %s751, %s739, 128, 128, 8
        $region55: #{tpu_custom_call.1} parent=39 // pred_fallthru
          _
      $region40: #{tpu_custom_call.1} parent=5 // pred_fallthru
        _
      %p759 = scmp.le.s32.totalorder 2, %s15
      // Predicated region
      $region56: #{tpu_custom_call.1} parent=5 // pred_check
        %p760 = pneg %p759
      $region57: #{tpu_custom_call.1} parent=5 // pred_check_branch
        %762 = sbr.rel (%p760) target = $region59
      $region58: #{tpu_custom_call.1} parent=5 // pred_region
        %s763 = ssub.s32 %s15, 2
        // Predicated region
        $region60: #{tpu_custom_call.1} parent=58 // pred_check
          %p764 = pneg %p159
        $region61: #{tpu_custom_call.1} parent=58 // pred_check_branch
          %766 = sbr.rel (%p764) target = $region63
        $region62: #{tpu_custom_call.1} parent=58 // pred_region
          %s767 = sand.u32 %s144, 1
          %s768 = scalar_lea.sflag [#allocation7], %s767
          %s769 = sand.u32 %s144, 1
          %s770 = smul.addr %s769, 16
          %s771 = scalar_lea.vmem [#allocation8], %s770
          %772 = dma.done %s768, 256
        $region63: #{tpu_custom_call.1} parent=58 // pred_fallthru
          _
      $region59: #{tpu_custom_call.1} parent=5 // pred_fallthru
        _
    $region6: #{tpu_custom_call.1} parent=1 // loop_footer
      %s19 = sadd.s32 1, %s15
    $region7: #{tpu_custom_call.1} parent=1 // loop_footer_branch
      %14 = sbr.rel target = $region3
    $region8: #{tpu_custom_call.1} parent=1 // loop_exit
      _
    %773 = vsyncpa [#allocation6], 1
    %s774 = scalar_lea.sflag [#allocation6], 1
    %775 = vsyncpa %s774, 1
    %776 = vsyncpa [#allocation7], 1
    %s777 = scalar_lea.sflag [#allocation7], 1
    %778 = vsyncpa %s777, 1

</llo_original>
